<compile_context>
chip_gen: v7x
topology: tpu7x:2x2x1
jax: 0.10.0
libtpu: 0.0.40
codegen_flags: <defaults>
</compile_context>

<pallas_src>
import functools

import jax
import jax.numpy as jnp
from jax.experimental import pallas as pl
from jax.experimental.pallas import tpu as pltpu


def _channel_attention_kernel(x_ref, w1_ref, w2_ref, o_ref, sum_ref, max_ref,
                              *, S, S_TILE, C):
    s = pl.program_id(1)
    num_s = pl.num_programs(1)
    k = S_TILE // 128
    unroll = 8 if k >= 8 else k

    @pl.when(s == 0)
    def _init():
        sum_ref[...] = jnp.zeros((C, 128), jnp.float32)
        max_ref[...] = jnp.full((C, 128), -jnp.inf, jnp.float32)

    def _fold(masked):
        # Fold the S_TILE/128 vreg columns of this tile into (C, 128) partials
        # with pure element-wise VPU ops (no cross-lane work in the hot loop).
        def body(j, carry):
            acc_s, acc_m = carry
            off = pl.multiple_of(j * 128, 128)
            col = x_ref[0, :, pl.ds(off, 128)].astype(jnp.float32)   # (C, 128)
            if masked:
                lane = jax.lax.broadcasted_iota(jnp.int32, (C, 128), 1)
                valid = (s * S_TILE + off + lane) < S
                col_s = jnp.where(valid, col, 0.0)
                col_m = jnp.where(valid, col, -jnp.inf)
            else:
                col_s = col
                col_m = col
            return acc_s + col_s, jnp.maximum(acc_m, col_m)

        init = (jnp.zeros((C, 128), jnp.float32),
                jnp.full((C, 128), -jnp.inf, jnp.float32))
        acc_s, acc_m = jax.lax.fori_loop(0, k, body, init, unroll=unroll)
        sum_ref[...] = sum_ref[...] + acc_s
        max_ref[...] = jnp.maximum(max_ref[...], acc_m)

    if S % S_TILE != 0:
        # Only the last S step can read past the end of x: keep all full tiles
        # on the unmasked (2 VALU ops / element) path.
        @pl.when(s != num_s - 1)
        def _full_tiles():
            _fold(masked=False)

        @pl.when(s == num_s - 1)
        def _ragged_tile():
            _fold(masked=True)
    else:
        _fold(masked=False)

    @pl.when(s == num_s - 1)
    def _epilogue():
        # Single cross-lane reduce + relayout to (1, C), once per batch row.
        avg_p = (jnp.sum(sum_ref[...], axis=-1) / jnp.float32(S))[None, :]  # (1, C)
        max_p = jnp.max(max_ref[...], axis=-1)[None, :]                     # (1, C)
        p = jnp.concatenate([avg_p, max_p], axis=0)                         # (2, C)
        w1 = w1_ref[...]                                   # (C, hidden), pre-transposed
        w2 = w2_ref[...]                                   # (hidden, C), pre-transposed
        h = jnp.maximum(
            jnp.dot(p, w1, preferred_element_type=jnp.float32), 0.0)        # (2, hidden)
        out = jnp.dot(h, w2, preferred_element_type=jnp.float32)            # (2, C)
        logits = out[0:1, :] + out[1:2, :]                 # fc(avg) + fc(max) -> (1, C)
        o_ref[...] = jax.nn.sigmoid(logits).reshape(1, 1, C)


def channel_attention(x_ncdhw, w1, w2, *, s_tile=None):
    """x_ncdhw: (N, C, D, H, W); w1: (C//16, C); w2: (C, C//16)
    (Conv3d 5-D weight shapes also accepted).  Returns (N, C, 1, 1, 1) f32."""
    N, C, D, H, W = x_ncdhw.shape
    S = D * H * W

    if w1.ndim == 5:
        w1 = w1.reshape(w1.shape[0], w1.shape[1])
    if w2.ndim == 5:
        w2 = w2.reshape(w2.shape[0], w2.shape[1])
    hidden = w1.shape[0]

    # Stream x in its NATIVE dtype (bf16/fp8 stays narrow on the HBM wire);
    # the f32 upcast happens inside the kernel.
    x = x_ncdhw.reshape(N, C, S)
    itemsize = int(x.dtype.itemsize)
    # Pre-transpose the (tiny) weights once in the wrapper.
    w1t = jnp.asarray(w1, jnp.float32).T                   # (C, hidden)
    w2t = jnp.asarray(w2, jnp.float32).T                   # (hidden, C)

    # --- Per-generation VMEM budget (v5e/v6e: 128 MiB, v7x: 64 MiB/TC). ---
    try:
        vmem_cap = int(pltpu.get_tpu_info().vmem_capacity_bytes)
    except Exception:
        vmem_cap = 64 << 20                                # conservative default
    if vmem_cap >= (128 << 20):
        x_budget, vmem_cap_limit = 80 << 20, 100 << 20     # v5e / v6e
    else:
        x_budget, vmem_cap_limit = 28 << 20, 48 << 20      # v7x headroom

    # --- S tiling: multiple of 128 lanes, as large as the budget allows (big
    # tiles amortize ~0.35 us/step overhead and lengthen contiguous DMA rows). ---
    s_full = pl.cdiv(S, 128) * 128
    if s_tile is None:
        lanes_by_budget = (x_budget // (2 * C * itemsize)) // 128 * 128
        s_tile = max(128, min(32768, lanes_by_budget, s_full))
    else:
        s_tile = max(128, pl.cdiv(s_tile, 128) * 128)
    num_s = pl.cdiv(S, s_tile)

    # Explicit scoped-VMEM limit: 2x-buffered x tile + weights + output + scratch.
    vmem_need = (2 * C * s_tile * itemsize                 # x double buffer
                 + 2 * 2 * C * hidden * 4                  # tiny weights, 2x buffered
                 + 2 * C * 4                               # output block
                 + 2 * C * 128 * 4                         # sum/max lane-partial scratch
                 + (4 << 20))                              # compiler scratch headroom
    vmem_limit = int(min(max(vmem_need, 16 << 20), vmem_cap_limit))

    kernel = functools.partial(_channel_attention_kernel, S=S, S_TILE=s_tile, C=C)

    cost = pl.CostEstimate(
        flops=int(2 * N * C * S + 8 * N * C * hidden),
        transcendentals=int(N * C),
        bytes_accessed=int(N * C * S * itemsize + N * C * 4 + 2 * C * hidden * 4),
    )

    # TODO(synk): for N == 1 on v7x only one TensorCore participates; splitting
    # the S range over a second "parallel" axis plus a tiny combine pass would
    # roughly double streaming throughput for that case.
    out = pl.pallas_call(
        kernel,
        out_shape=jax.ShapeDtypeStruct((N, 1, C), jnp.float32),
        grid=(N, num_s),
        in_specs=[
            # x streamed over the S (reduction) axis, one batch row per step.
            pl.BlockSpec((1, C, s_tile), lambda n, s: (n, 0, s)),
            # Weights: constant block index -> resident in VMEM across S steps.
            pl.BlockSpec((C, hidden), lambda n, s: (0, 0)),
            pl.BlockSpec((hidden, C), lambda n, s: (0, 0)),
        ],
        out_specs=pl.BlockSpec((1, 1, C), lambda n, s: (n, 0, 0)),
        scratch_shapes=[
            pltpu.VMEM((C, 128), jnp.float32),             # running lane-partial sum
            pltpu.VMEM((C, 128), jnp.float32),             # running lane-partial max
        ],
        compiler_params=pltpu.CompilerParams(
            dimension_semantics=("parallel", "arbitrary"),
            vmem_limit_bytes=vmem_limit),
        cost_estimate=cost,
    )(x, w1t, w2t)

    return out.reshape(N, C, 1, 1, 1)


def channel_attention_reference(x_ncdhw, w1, w2):
    """Plain-JAX reference mirroring the PyTorch forward pass."""
    avg = jnp.mean(x_ncdhw, axis=(2, 3, 4))                # (N, C)
    mx = jnp.max(x_ncdhw, axis=(2, 3, 4))                  # (N, C)

    def fc(p):
        h = jnp.maximum(p @ w1.T, 0.0)
        return h @ w2.T

    out = fc(avg) + fc(mx)
    return jax.nn.sigmoid(out).reshape(*out.shape, 1, 1, 1)


if __name__ == "__main__":
    key = jax.random.PRNGKey(0)
    k_x1, k_x2, k_x3, k_w1, k_w2 = jax.random.split(key, 5)

    N, C = 2, 32
    hidden = C // 16  # ratio hard-coded to 16 in the module's fc

    # Conv3d weights (out_ch, in_ch, 1, 1, 1) squeezed to (out_ch, in_ch).
    w1 = jax.random.normal(k_w1, (hidden, C), dtype=jnp.float32) * 0.1
    w2 = jax.random.normal(k_w2, (C, hidden), dtype=jnp.float32) * 0.1

    # Case 1: S = 256, auto tile (single streaming step, no masking).
    x1 = jax.random.normal(k_x1, (N, C, 4, 8, 8), dtype=jnp.float32)
    out1 = jax.block_until_ready(channel_attention(x1, w1, w2))
    ref1 = channel_attention_reference(x1, w1, w2)
    assert out1.shape == (N, C, 1, 1, 1)
    assert jnp.allclose(out1, ref1, rtol=1e-5, atol=1e-5)

    # Case 2: S = 240 with s_tile=128 -> 2 streaming steps with a ragged last
    # tile; exercises running accumulation and last-step-only lane masking.
    x2 = jax.random.normal(k_x2, (N, C, 3, 8, 10), dtype=jnp.float32)
    out2 = jax.block_until_ready(channel_attention(x2, w1, w2, s_tile=128))
    ref2 = channel_attention_reference(x2, w1, w2)
    assert jnp.allclose(out2, ref2, rtol=1e-5, atol=1e-5)

    # Case 3: bf16 input streamed in native dtype (3 steps, ragged tail).
    x3 = (jax.random.normal(k_x3, (N, C, 5, 8, 9), dtype=jnp.float32)
          .astype(jnp.bfloat16))
    out3 = jax.block_until_ready(channel_attention(x3, w1, w2, s_tile=128))
    ref3 = channel_attention_reference(x3.astype(jnp.float32), w1, w2)
    assert jnp.allclose(out3, ref3, rtol=2e-3, atol=2e-3)

    print("KERNEL_OK")
</pallas_src>

<mosaic_0001>
module attributes {stable_mosaic.version = 11 : i64} {
  func.func @_channel_attention_kernel(%arg0: i32, %arg1: i32, %arg2: memref<1x32x256xf32, #tpu.memory_space<vmem>>, %arg3: memref<32x2xf32, #tpu.memory_space<vmem>>, %arg4: memref<2x32xf32, #tpu.memory_space<vmem>>, %arg5: memref<1x1x32xf32, #tpu.memory_space<vmem>>, %arg6: memref<32x128xf32, #tpu.memory_space<vmem>>, %arg7: memref<32x128xf32, #tpu.memory_space<vmem>>) attributes {dimension_semantics = [#tpu.dimension_semantics<parallel>, #tpu.dimension_semantics<arbitrary>], iteration_bounds = array<i64: 2, 1>, scalar_prefetch = 0 : i64, scratch_operands = 2 : i64, tpu.core_type = #tpu.core_type<tc>, window_params = [{transform_indices = @transform_0, window_bounds = array<i64: 1, 32, 256>}, {pipeline_mode = #tpu.pipeline_mode<synchronous>, transform_indices = @transform_1, window_bounds = array<i64: 32, 2>}, {pipeline_mode = #tpu.pipeline_mode<synchronous>, transform_indices = @transform_2, window_bounds = array<i64: 2, 32>}, {transform_indices = @transform_3, window_bounds = array<i64: 1, 1, 32>}]} {
    %c0_i32 = arith.constant 0 : i32
    %0 = arith.cmpi eq, %arg1, %c0_i32 : i32
    %1 = arith.extui %0 : i1 to i32
    %c0_i32_0 = arith.constant 0 : i32
    %2 = arith.cmpi ne, %1, %c0_i32_0 : i32
    scf.if %2 {
      %cst_17 = arith.constant 0.000000e+00 : f32
      %28 = vector.broadcast %cst_17 : f32 to vector<32x128xf32>
      %c0_18 = arith.constant 0 : index
      %c0_19 = arith.constant 0 : index
      %29 = vector.load %arg6[%c0_18, %c0_19] : memref<32x128xf32, #tpu.memory_space<vmem>>, vector<32x128xf32>
      tpu.vector_store %arg6[%c0_18, %c0_19], %28 {strides = array<i32>} : memref<32x128xf32, #tpu.memory_space<vmem>>, vector<32x128xf32>,
      %cst_20 = arith.constant 0xFF800000 : f32
      %30 = vector.broadcast %cst_20 : f32 to vector<32x128xf32>
      %c0_21 = arith.constant 0 : index
      %c0_22 = arith.constant 0 : index
      %31 = vector.load %arg7[%c0_21, %c0_22] : memref<32x128xf32, #tpu.memory_space<vmem>>, vector<32x128xf32>
      tpu.vector_store %arg7[%c0_21, %c0_22], %30 {strides = array<i32>} : memref<32x128xf32, #tpu.memory_space<vmem>>, vector<32x128xf32>,
    } else {
    }
    %cst = arith.constant 0.000000e+00 : f32
    %3 = vector.broadcast %cst : f32 to vector<32x128xf32>
    %cst_1 = arith.constant 0xFF800000 : f32
    %4 = vector.broadcast %cst_1 : f32 to vector<32x128xf32>
    %c0_i32_2 = arith.constant 0 : i32
    %c128_i32 = arith.constant 128 : i32
    %5 = arith.muli %c0_i32_2, %c128_i32 : i32
    %6 = tpu.assume_multiple %5, 128 : i32
    %c0 = arith.constant 0 : index
    %c0_3 = arith.constant 0 : index
    %7 = arith.index_cast %6 : i32 to index
    %8 = vector.load %arg2[%c0, %c0_3, %7] : memref<1x32x256xf32, #tpu.memory_space<vmem>>, vector<1x32x128xf32>
    %9 = vector.shape_cast %8 : vector<1x32x128xf32> to vector<32x128xf32>
    %10 = arith.addf %3, %9 : vector<32x128xf32>
    %11 = arith.maximumf %4, %9 : vector<32x128xf32>
    %c1_i32 = arith.constant 1 : i32
    %c128_i32_4 = arith.constant 128 : i32
    %12 = arith.muli %c1_i32, %c128_i32_4 : i32
    %13 = tpu.assume_multiple %12, 128 : i32
    %c0_5 = arith.constant 0 : index
    %c0_6 = arith.constant 0 : index
    %14 = arith.index_cast %13 : i32 to index
    %15 = vector.load %arg2[%c0_5, %c0_6, %14] : memref<1x32x256xf32, #tpu.memory_space<vmem>>, vector<1x32x128xf32>
    %16 = vector.shape_cast %15 : vector<1x32x128xf32> to vector<32x128xf32>
    %17 = arith.addf %10, %16 : vector<32x128xf32>
    %18 = arith.maximumf %11, %16 : vector<32x128xf32>
    %c2_i32 = arith.constant 2 : i32
    %c0_7 = arith.constant 0 : index
    %c0_8 = arith.constant 0 : index
    %19 = vector.load %arg6[%c0_7, %c0_8] : memref<32x128xf32, #tpu.memory_space<vmem>>, vector<32x128xf32>
    %20 = arith.addf %19, %17 : vector<32x128xf32>
    %c0_9 = arith.constant 0 : index
    %c0_10 = arith.constant 0 : index
    %21 = vector.load %arg6[%c0_9, %c0_10] : memref<32x128xf32, #tpu.memory_space<vmem>>, vector<32x128xf32>
    tpu.vector_store %arg6[%c0_9, %c0_10], %20 {strides = array<i32>} : memref<32x128xf32, #tpu.memory_space<vmem>>, vector<32x128xf32>,
    %c0_11 = arith.constant 0 : index
    %c0_12 = arith.constant 0 : index
    %22 = vector.load %arg7[%c0_11, %c0_12] : memref<32x128xf32, #tpu.memory_space<vmem>>, vector<32x128xf32>
    %23 = arith.maximumf %22, %18 : vector<32x128xf32>
    %c0_13 = arith.constant 0 : index
    %c0_14 = arith.constant 0 : index
    %24 = vector.load %arg7[%c0_13, %c0_14] : memref<32x128xf32, #tpu.memory_space<vmem>>, vector<32x128xf32>
    tpu.vector_store %arg7[%c0_13, %c0_14], %23 {strides = array<i32>} : memref<32x128xf32, #tpu.memory_space<vmem>>, vector<32x128xf32>,
    %c0_i32_15 = arith.constant 0 : i32
    %25 = arith.cmpi eq, %arg1, %c0_i32_15 : i32
    %26 = arith.extui %25 : i1 to i32
    %c0_i32_16 = arith.constant 0 : i32
    %27 = arith.cmpi ne, %26, %c0_i32_16 : i32
    scf.if %27 {
      %c0_17 = arith.constant 0 : index
      %c0_18 = arith.constant 0 : index
      %28 = vector.load %arg6[%c0_17, %c0_18] : memref<32x128xf32, #tpu.memory_space<vmem>>, vector<32x128xf32>
      %cst_19 = arith.constant dense<0.000000e+00> : vector<32xf32>
      %29 = vector.multi_reduction <add>, %28, %cst_19 [1] : vector<32x128xf32> to vector<32xf32>
      %cst_20 = arith.constant 2.560000e+02 : f32
      %30 = vector.broadcast %cst_20 : f32 to vector<32xf32>
      %31 = arith.divf %29, %30 : vector<32xf32>
      %32 = vector.shape_cast %31 : vector<32xf32> to vector<1x32xf32>
      %c0_21 = arith.constant 0 : index
      %c0_22 = arith.constant 0 : index
      %33 = vector.load %arg7[%c0_21, %c0_22] : memref<32x128xf32, #tpu.memory_space<vmem>>, vector<32x128xf32>
      %cst_23 = arith.constant dense<0xFF800000> : vector<32xf32>
      %34 = vector.multi_reduction <maximumf>, %33, %cst_23 [1] : vector<32x128xf32> to vector<32xf32>
      %35 = vector.shape_cast %34 : vector<32xf32> to vector<1x32xf32>
      %36 = tpu.concatenate %32, %35 in 0 : vector<1x32xf32>, vector<1x32xf32> -> vector<2x32xf32>
      %c0_24 = arith.constant 0 : index
      %c0_25 = arith.constant 0 : index
      %37 = vector.load %arg3[%c0_24, %c0_25] : memref<32x2xf32, #tpu.memory_space<vmem>>, vector<32x2xf32>
      %c0_26 = arith.constant 0 : index
      %c0_27 = arith.constant 0 : index
      %38 = vector.load %arg4[%c0_26, %c0_27] : memref<2x32xf32, #tpu.memory_space<vmem>>, vector<2x32xf32>
      %cst_28 = arith.constant dense<0.000000e+00> : vector<2x2xf32>
      %39 = tpu.matmul %36, %37, %cst_28 {dimension_numbers = #tpu.dot_dimension_numbers<[1], [0], [0], [1], [0, 0, 1, 1], [], []>} : vector<2x32xf32>, vector<32x2xf32>, vector<2x2xf32> -> vector<2x2xf32>
      %cst_29 = arith.constant 0.000000e+00 : f32
      %40 = vector.broadcast %cst_29 : f32 to vector<2x2xf32>
      %41 = arith.maximumf %39, %40 : vector<2x2xf32>
      %cst_30 = arith.constant dense<0.000000e+00> : vector<2x32xf32>
      %42 = tpu.matmul %41, %38, %cst_30 {dimension_numbers = #tpu.dot_dimension_numbers<[1], [0], [0], [1], [0, 0, 1, 1], [], []>} : vector<2x2xf32>, vector<2x32xf32>, vector<2x32xf32> -> vector<2x32xf32>
      %43 = vector.extract_strided_slice %42 {offsets = [0, 0], sizes = [1, 32], strides = [1, 1]} : vector<2x32xf32> to vector<1x32xf32>
      %44 = vector.extract_strided_slice %42 {offsets = [1, 0], sizes = [1, 32], strides = [1, 1]} : vector<2x32xf32> to vector<1x32xf32>
      %45 = arith.addf %43, %44 : vector<1x32xf32>
      %46 = arith.negf %45 : vector<1x32xf32>
      %47 = math.exp %46 : vector<1x32xf32>
      %cst_31 = arith.constant 1.000000e+00 : f32
      %48 = vector.broadcast %cst_31 : f32 to vector<1x32xf32>
      %49 = arith.addf %48, %47 : vector<1x32xf32>
      %50 = arith.divf %48, %49 : vector<1x32xf32>
      %51 = vector.shape_cast %50 : vector<1x32xf32> to vector<1x1x32xf32>
      %c0_32 = arith.constant 0 : index
      %c0_33 = arith.constant 0 : index
      %c0_34 = arith.constant 0 : index
      %52 = vector.load %arg5[%c0_32, %c0_33, %c0_34] : memref<1x1x32xf32, #tpu.memory_space<vmem>>, vector<1x1x32xf32>
      tpu.vector_store %arg5[%c0_32, %c0_33, %c0_34], %51 {strides = array<i32>} : memref<1x1x32xf32, #tpu.memory_space<vmem>>, vector<1x1x32xf32>,
    } else {
    }
    return
  }
  func.func @transform_0(%arg0: i32, %arg1: i32) -> (i32, i32, i32) {
    %c0_i32 = arith.constant 0 : i32
    %c0_i32_0 = arith.constant 0 : i32
    return %arg0, %c0_i32, %arg1 : i32, i32, i32
  }
  func.func @transform_1(%arg0: i32, %arg1: i32) -> (i32, i32) {
    %c0_i32 = arith.constant 0 : i32
    %c0_i32_0 = arith.constant 0 : i32
    %c0_i32_1 = arith.constant 0 : i32
    return %c0_i32, %c0_i32_0 : i32, i32
  }
  func.func @transform_2(%arg0: i32, %arg1: i32) -> (i32, i32) {
    %c0_i32 = arith.constant 0 : i32
    %c0_i32_0 = arith.constant 0 : i32
    %c0_i32_1 = arith.constant 0 : i32
    return %c0_i32, %c0_i32_0 : i32, i32
  }
  func.func @transform_3(%arg0: i32, %arg1: i32) -> (i32, i32, i32) {
    %c0_i32 = arith.constant 0 : i32
    %c0_i32_0 = arith.constant 0 : i32
    %c0_i32_1 = arith.constant 0 : i32
    return %arg0, %c0_i32, %c0_i32_0 : i32, i32, i32
  }
}

</mosaic_0001>

<llo_original>
// kernel: tpu_custom_call.1
$region0: #{tpu_custom_call.1}
  #allocation0 [shape = 'u32[]', space=smem, size = 0x4, offset = 0x4, fixed_abs, tag = 'smem constant byte address 0x4 - core index']
  #allocation1 [shape = 'u32[144,128]{1,0:T(1,128)}', space=vmem, size = 0x12000, scoped, tag = 'internal scratch']
  #allocation2 [shape = 'f32[32,128]{1,0:T(8,128)}', space=vmem, size = 0x4000, scoped, tag = 'scratch operand']
  #allocation3 [shape = 'f32[32,128]{1,0:T(8,128)}', space=vmem, size = 0x4000, scoped, tag = 'scratch operand']
  %s0 = inlined_call_operand.hbm [shape: f32[2,32,256], index: 0, kind: input, shape index: {}]
  %s1 = inlined_call_operand.vmem [shape: f32[32,2], index: 1, kind: input, shape index: {}]
  %s2 = inlined_call_operand.vmem [shape: f32[2,32], index: 2, kind: input, shape index: {}]
  %s3 = inlined_call_operand.hbm [shape: f32[2,1,32], index: 3, kind: output, shape index: {}]
  %s4 = sld [smem:[#allocation0]]
  $region57: #{tpu_custom_call.1} parent=0
    _
  %s6 = ssub.s32 1, %s4
  %s7 = scalar_select 0, %s6, %s4
  $region1: #{tpu_custom_call.1} parent=0
    #allocation4 [shape = 'u8[65536]{0}', space=vmem, size = 0x10000, scoped, tag = 'input window, operand 0']
    #allocation5 [shape = 's32[2]{0}', space=sflag, size = 0x8, scoped, tag = 'scoped memory for tpu_custom_call.1']
    #allocation6 [shape = 's32[2]{0}', space=sflag, size = 0x8, scoped, tag = 'scoped memory for tpu_custom_call.1']
    #allocation7 [shape = 'u8[1024]{0}', space=vmem, size = 0x400, scoped, tag = 'output window, operand 0']
    %8 = vsyncpa [#allocation5], 0
    %s9 = scalar_lea.sflag [#allocation5], 1
    %10 = vsyncpa %s9, 0
    %11 = vsyncpa [#allocation6], 0
    %s12 = scalar_lea.sflag [#allocation6], 1
    %13 = vsyncpa %s12, 0
    loop: start=0, step=1, limit=4
    $region2: #{tpu_custom_call.1} parent=1 // loop_pre_header
      _
    $region3: #{tpu_custom_call.1} parent=1 // loop_header
      %s15 = sphi 0, %s19
      %p16 = scmp.ge.s32.totalorder %s15, 4
      %s22 = sphi 0, %s34
      %s23 = sphi 0, %s30
      %s24 = sphi 0, %s22
      %s25 = sphi 0, %s23
      %s26 = sphi 0, %s24
      %s27 = sphi 0, %s25
      %s39 = sphi 0, %s41
      %s42 = sphi 0, %s39
      %s43 = sphi 0, %s42
      %s59 = sphi 0, %s43
      %s63 = sphi 0, %s63
      %s65 = sphi 0, %s63
      %s66 = sphi 0, %s65
      %s80 = sphi 0, %s66
      %s84 = sphi 0, %s84
      %s86 = sphi 0, %s84
      %s87 = sphi 0, %s86
      %s101 = sphi 0, %s87
      %s107 = sphi 0, %s109
      %s110 = sphi 0, %s107
      %s111 = sphi 0, %s110
      %s127 = sphi 0, %s111
    $region4: #{tpu_custom_call.1} parent=1 // loop_header_branch
      %18 = sbr.rel (%p16) target = $region8
    $region5: #{tpu_custom_call.1} parent=1 // loop_body
      %s20 = ssub.s32 %s15, 1
      %s21 = ssub.s32 %s15, 2
      %s28 = sadd.s32 1, %s23
      %p29 = scmp.ge.s32.totalorder %s28, 1
      %s30 = scalar_select %p29, 0, %s28
      %s31 = sadd.s32 1, %s22
      %s32 = scalar_select %p29, %s31, %s22
      %p33 = scmp.ge.s32.totalorder %s32, 2
      %s34 = scalar_select %p33, 0, %s32
      %s35 = ssub.s32 %s22, %s34
      %s36 = ssub.s32 %s23, %s30
      %s37 = sor.u32 %s35, %s36
      %p38 = scmp.eq.s32.totalorder %s37, 0
      %s40 = sadd.s32 %s39, 1
      %s41 = scalar_select %p38, %s39, %s40
      %p44 = pneg %p38
      %p45 = scmp.eq.s32.totalorder %s15, 1
      %p46 = por %p44, %p45
      %p47 = scmp.ne.s32.totalorder %s39, %s42
      %p48 = scmp.eq.s32.totalorder %s15, 0
      %p49 = por %p47, %p48
      %p50 = scmp.ne.s32.totalorder %s39, %s42
      %p51 = scmp.eq.s32.totalorder %s20, 1
      %p52 = por %p50, %p51
      %p53 = scmp.ne.s32.totalorder %s42, %s43
      %p54 = scmp.eq.s32.totalorder %s20, 0
      %p55 = por %p53, %p54
      %p56 = scmp.ne.s32.totalorder %s42, %s43
      %p57 = scmp.eq.s32.totalorder %s21, 1
      %p58 = por %p56, %p57
      %p60 = scmp.ne.s32.totalorder %s43, %s59
      %p61 = scmp.eq.s32.totalorder %s21, 0
      %p62 = por %p60, %p61
      %s64 = sadd.s32 %s63, 1
      %p67 = scmp.eq.s32.totalorder %s15, 1
      %p68 = scmp.ne.s32.totalorder %s63, %s65
      %p69 = scmp.eq.s32.totalorder %s15, 0
      %p70 = por %p68, %p69
      %p71 = scmp.ne.s32.totalorder %s63, %s65
      %p72 = scmp.eq.s32.totalorder %s20, 1
      %p73 = por %p71, %p72
      %p74 = scmp.ne.s32.totalorder %s65, %s66
      %p75 = scmp.eq.s32.totalorder %s20, 0
      %p76 = por %p74, %p75
      %p77 = scmp.ne.s32.totalorder %s65, %s66
      %p78 = scmp.eq.s32.totalorder %s21, 1
      %p79 = por %p77, %p78
      %p81 = scmp.ne.s32.totalorder %s66, %s80
      %p82 = scmp.eq.s32.totalorder %s21, 0
      %p83 = por %p81, %p82
      %s85 = sadd.s32 %s84, 1
      %p88 = scmp.eq.s32.totalorder %s15, 1
      %p89 = scmp.ne.s32.totalorder %s84, %s86
      %p90 = scmp.eq.s32.totalorder %s15, 0
      %p91 = por %p89, %p90
      %p92 = scmp.ne.s32.totalorder %s84, %s86
      %p93 = scmp.eq.s32.totalorder %s20, 1
      %p94 = por %p92, %p93
      %p95 = scmp.ne.s32.totalorder %s86, %s87
      %p96 = scmp.eq.s32.totalorder %s20, 0
      %p97 = por %p95, %p96
      %p98 = scmp.ne.s32.totalorder %s86, %s87
      %p99 = scmp.eq.s32.totalorder %s21, 1
      %p100 = por %p98, %p99
      %p102 = scmp.ne.s32.totalorder %s87, %s101
      %p103 = scmp.eq.s32.totalorder %s21, 0
      %p104 = por %p102, %p103
      %s105 = ssub.s32 %s22, %s34
      %p106 = scmp.eq.s32.totalorder %s105, 0
      %s108 = sadd.s32 %s107, 1
      %s109 = scalar_select %p106, %s107, %s108
      %p112 = pneg %p106
      %p113 = scmp.eq.s32.totalorder %s15, 1
      %p114 = por %p112, %p113
      %p115 = scmp.ne.s32.totalorder %s107, %s110
      %p116 = scmp.eq.s32.totalorder %s15, 0
      %p117 = por %p115, %p116
      %p118 = scmp.ne.s32.totalorder %s107, %s110
      %p119 = scmp.eq.s32.totalorder %s20, 1
      %p120 = por %p118, %p119
      %p121 = scmp.ne.s32.totalorder %s110, %s111
      %p122 = scmp.eq.s32.totalorder %s20, 0
      %p123 = por %p121, %p122
      %p124 = scmp.ne.s32.totalorder %s110, %s111
      %p125 = scmp.eq.s32.totalorder %s21, 1
      %p126 = por %p124, %p125
      %p128 = scmp.ne.s32.totalorder %s111, %s127
      %p129 = scmp.eq.s32.totalorder %s21, 0
      %p130 = por %p128, %p129
      %p131 = scmp.le.s32.totalorder 1, %s15
      %p132 = scmp.lt.s32.totalorder %s15, 3
      %p133 = pnand %p131, %p132
      %p134 = pneg %p133
      // Predicated region
      $region9: #{tpu_custom_call.1} parent=5 // pred_check
        _
      $region10: #{tpu_custom_call.1} parent=5 // pred_check_branch
        %136 = sbr.rel (%p133) target = $region12
      $region11: #{tpu_custom_call.1} parent=5 // pred_region
        %s137 = ssub.s32 %s15, 1
        // Predicated region
        $region13: #{tpu_custom_call.1} parent=11 // pred_check
          %p138 = pneg %p76
        $region14: #{tpu_custom_call.1} parent=11 // pred_check_branch
          %140 = sbr.rel (%p138) target = $region16
        $region15: #{tpu_custom_call.1} parent=11 // pred_region
          _
        $region16: #{tpu_custom_call.1} parent=11 // pred_fallthru
          _
        // Predicated region
        $region17: #{tpu_custom_call.1} parent=11 // pred_check
          %p141 = pneg %p97
        $region18: #{tpu_custom_call.1} parent=11 // pred_check_branch
          %143 = sbr.rel (%p141) target = $region20
        $region19: #{tpu_custom_call.1} parent=11 // pred_region
          _
        $region20: #{tpu_custom_call.1} parent=11 // pred_fallthru
          _
      $region12: #{tpu_custom_call.1} parent=5 // pred_fallthru
        _
      %p144 = scmp.lt.s32.totalorder %s15, 2
      // Predicated region
      $region21: #{tpu_custom_call.1} parent=5 // pred_check
        %p145 = pneg %p144
      $region22: #{tpu_custom_call.1} parent=5 // pred_check_branch
        %147 = sbr.rel (%p145) target = $region24
      $region23: #{tpu_custom_call.1} parent=5 // pred_region
        // Predicated region
        $region25: #{tpu_custom_call.1} parent=23 // pred_check
          %p148 = pneg %p49
        $region26: #{tpu_custom_call.1} parent=23 // pred_check_branch
          %150 = sbr.rel (%p148) target = $region28
        $region27: #{tpu_custom_call.1} parent=23 // pred_region
          %s151 = sand.u32 %s39, 1
          %s152 = scalar_lea.sflag [#allocation5], %s151
          %s153 = sand.u32 %s39, 1
          %s154 = smul.addr %s153, 64
          %s155 = scalar_lea.vmem [#allocation4], %s154
          %s156 = smul.u32 2, %s23
          %s158 = ssub.s32 1024, 1024
          %159 = vsyncadd %s152, %s158
          %s160 = smul.addr %s22, 8
          %s161 = sadd.s32 %s156, %s160
          %s162 = smul.addr %s161, 128
          %s163 = scalar_lea.hbm %s0, %s162
          %s164 = sshll.u32 %s155, 4
          %s165 = int_to_ptr.vmem [resolvable:$true] %s164
          %170 = dma.hbm_to_vmem [thread:$0]  %s163, 1024, %s165, %s152, 256, 256, 16
        $region28: #{tpu_custom_call.1} parent=23 // pred_fallthru
          _
      $region24: #{tpu_custom_call.1} parent=5 // pred_fallthru
        _
      %p171 = scmp.le.s32.totalorder 1, %s15
      %p172 = scmp.lt.s32.totalorder %s15, 3
      %p173 = pnand %p171, %p172
      %p174 = pneg %p173
      // Predicated region
      $region29: #{tpu_custom_call.1} parent=5 // pred_check
        _
      $region30: #{tpu_custom_call.1} parent=5 // pred_check_branch
        %176 = sbr.rel (%p173) target = $region32
      $region31: #{tpu_custom_call.1} parent=5 // pred_region
        %s177 = ssub.s32 %s15, 1
        %s178 = sand.u32 %s42, 1
        %s179 = scalar_lea.sflag [#allocation5], %s178
        %s180 = sand.u32 %s42, 1
        %s181 = smul.addr %s180, 64
        %s182 = scalar_lea.vmem [#allocation4], %s181
        // Predicated region
        $region33: #{tpu_custom_call.1} parent=31 // pred_check
          %p183 = pneg %p55
        $region34: #{tpu_custom_call.1} parent=31 // pred_check_branch
          %185 = sbr.rel (%p183) target = $region36
        $region35: #{tpu_custom_call.1} parent=31 // pred_region
          %186 = dma.done %s179, 1024
        $region36: #{tpu_custom_call.1} parent=31 // pred_fallthru
          _
        %s187 = sand.u32 %s42, 1
        %s188 = scalar_lea.sflag [#allocation5], %s187
        %s189 = sand.u32 %s42, 1
        %s190 = smul.addr %s189, 64
        %s191 = scalar_lea.vmem [#allocation4], %s190
        %p192 = pneg %p55
        %p193 = pneg %p52
        %p194 = pneg %p76
        %p195 = pneg %p73
        %p196 = pneg %p97
        %p197 = pneg %p94
        %p198 = pneg %p123
        %p199 = pneg %p120
        %s200 = sand.u32 %s110, 1
        %s201 = scalar_lea.sflag [#allocation6], %s200
        %s202 = sand.u32 %s110, 1
        %s203 = scalar_lea.vmem [#allocation7], %s202
        %s204 = smul.u32 2, %s25
        %p205 = scmp.eq.s32.totalorder %s25, 0
        // Predicated region
        $region37: #{tpu_custom_call.1} parent=31 // pred_check
          %p206 = pneg %p205
        $region38: #{tpu_custom_call.1} parent=31 // pred_check_branch
          %208 = sbr.rel (%p206) target = $region40
        $region39: #{tpu_custom_call.1} parent=31 // pred_region
          %209 = vst [vmem:[#allocation2] sm:$0xff] 0.0
          %210 = vst [vmem:[#allocation2 + $0x8] sm:$0xff] 0.0
          %211 = vst [vmem:[#allocation2 + $0x10] sm:$0xff] 0.0
          %212 = vst [vmem:[#allocation2 + $0x18] sm:$0xff] 0.0
          %213 = vst [vmem:[#allocation3] sm:$0xff] -inf
          %214 = vst [vmem:[#allocation3 + $0x8] sm:$0xff] -inf
          %215 = vst [vmem:[#allocation3 + $0x10] sm:$0xff] -inf
          %216 = vst [vmem:[#allocation3 + $0x18] sm:$0xff] -inf
        $region40: #{tpu_custom_call.1} parent=31 // pred_fallthru
          _
        %v217 = vld [vmem:[%s182] sm:$0xff]
        %v218 = vld [vmem:[%s182 + $0x10] sm:$0xff]
        %v219 = vld [vmem:[%s182 + $0x20] sm:$0xff]
        %v220 = vld [vmem:[%s182 + $0x30] sm:$0xff]
        %v221 = vadd.f32 %v217, 0.0
        %v222 = vadd.f32 %v218, 0.0
        %v223 = vadd.f32 %v219, 0.0
        %v224 = vadd.f32 %v220, 0.0
        %s225 = scalar_lea.vmem %s182, 8 [#allocation4]
        %v226 = vld [vmem:[%s225] sm:$0xff]
        %v227 = vld [vmem:[%s225 + $0x10] sm:$0xff]
        %v228 = vld [vmem:[%s225 + $0x20] sm:$0xff]
        %v229 = vld [vmem:[%s225 + $0x30] sm:$0xff]
        %v230 = vadd.f32 %v221, %v226
        %v231 = vadd.f32 %v222, %v227
        %v232 = vadd.f32 %v223, %v228
        %v233 = vadd.f32 %v224, %v229
        %v234 = vmax.f32 %v217, %v226
        %v235 = vmax.f32 %v218, %v227
        %v236 = vmax.f32 %v219, %v228
        %v237 = vmax.f32 %v220, %v229
        %v238 = vld [vmem:[#allocation2] sm:$0xff]
        %v239 = vld [vmem:[#allocation2 + $0x8] sm:$0xff]
        %v240 = vld [vmem:[#allocation2 + $0x10] sm:$0xff]
        %v241 = vld [vmem:[#allocation2 + $0x18] sm:$0xff]
        %v242 = vadd.f32 %v238, %v230
        %v243 = vadd.f32 %v239, %v231
        %v244 = vadd.f32 %v240, %v232
        %v245 = vadd.f32 %v241, %v233
        %246 = vst [vmem:[#allocation2] sm:$0xff] %v242
        %247 = vst [vmem:[#allocation2 + $0x8] sm:$0xff] %v243
        %248 = vst [vmem:[#allocation2 + $0x10] sm:$0xff] %v244
        %249 = vst [vmem:[#allocation2 + $0x18] sm:$0xff] %v245
        %v250 = vld [vmem:[#allocation3] sm:$0xff]
        %v251 = vld [vmem:[#allocation3 + $0x8] sm:$0xff]
        %v252 = vld [vmem:[#allocation3 + $0x10] sm:$0xff]
        %v253 = vld [vmem:[#allocation3 + $0x18] sm:$0xff]
        %v254 = vmax.f32 %v250, %v234
        %v255 = vmax.f32 %v251, %v235
        %v256 = vmax.f32 %v252, %v236
        %v257 = vmax.f32 %v253, %v237
        %258 = vst [vmem:[#allocation3] sm:$0xff] %v254
        %259 = vst [vmem:[#allocation3 + $0x8] sm:$0xff] %v255
        %260 = vst [vmem:[#allocation3 + $0x10] sm:$0xff] %v256
        %261 = vst [vmem:[#allocation3 + $0x18] sm:$0xff] %v257
        // Predicated region
        $region41: #{tpu_custom_call.1} parent=31 // pred_check
          %p262 = pneg %p205
        $region42: #{tpu_custom_call.1} parent=31 // pred_check_branch
          %264 = sbr.rel (%p262) target = $region44
        $region43: #{tpu_custom_call.1} parent=31 // pred_region
          %v265 = vld [vmem:[#allocation2] sm:$0xff]
          %v266 = vld [vmem:[#allocation2 + $0x8] sm:$0xff]
          %v267 = vld [vmem:[#allocation2 + $0x10] sm:$0xff]
          %v268 = vld [vmem:[#allocation2 + $0x18] sm:$0xff]
          %269 = vadd.xlane.f32.xlu0 %v265
          %v270 = vpop.xlane.xlu0 %269
          %271 = vadd.xlane.f32.xlu0 %v266
          %v272 = vpop.xlane.xlu0 %271
          %273 = vadd.xlane.f32.xlu0 %v267
          %v274 = vpop.xlane.xlu0 %273
          %275 = vadd.xlane.f32.xlu0 %v268
          %v276 = vpop.xlane.xlu0 %275
          %v277 = vrcp.pop 256.0
          %v278 = vmul.f32 %v270, %v277
          %v279 = vmul.f32 %v272, %v277
          %v280 = vmul.f32 %v274, %v277
          %v281 = vmul.f32 %v276, %v277
          %v282 = vld [vmem:[#allocation3] sm:$0xff]
          %v283 = vld [vmem:[#allocation3 + $0x8] sm:$0xff]
          %v284 = vld [vmem:[#allocation3 + $0x10] sm:$0xff]
          %v285 = vld [vmem:[#allocation3 + $0x18] sm:$0xff]
          %286 = vmax.xlane.f32.xlu0 %v282
          %v287 = vpop.xlane.xlu0 %286
          %288 = vmax.xlane.f32.xlu0 %v283
          %v289 = vpop.xlane.xlu0 %288
          %290 = vmax.xlane.f32.xlu0 %v284
          %v291 = vpop.xlane.xlu0 %290
          %292 = vmax.xlane.f32.xlu0 %v285
          %v293 = vpop.xlane.xlu0 %292
          %v298 = vlaneseq
          %v299 = vand.u32 %v298, 127
          %v300 = vlaneseq
          %v301 = vshrl.u32 %v300, 7
          %v302 = vsub.s32 %v299, %v301
          %v303 = vrot.slane %v278, %v302
          %v304 = vadd.s32 %v299, 4294967288
          %v305 = vlaneseq
          %v306 = vshrl.u32 %v305, 7
          %v307 = vsub.s32 %v304, %v306
          %v308 = vrot.slane %v279, %v307
          %vm309 = vcmask 130112
          %v310 = vsel %vm309, %v308, %v303
          %v311 = vadd.s32 %v299, 4294967280
          %v312 = vlaneseq
          %v313 = vshrl.u32 %v312, 7
          %v314 = vsub.s32 %v311, %v313
          %v315 = vrot.slane %v280, %v314
          %vm316 = vcmask 195712
          %v317 = vsel %vm316, %v315, %v310
          %v318 = vadd.s32 %v299, 4294967272
          %v319 = vlaneseq
          %v320 = vshrl.u32 %v319, 7
          %v321 = vsub.s32 %v318, %v320
          %v322 = vrot.slane %v281, %v321
          %vm323 = vcmask 261312
          %v324 = vsel %vm323, %v322, %v317
          %v330 = vlaneseq
          %v331 = vshrl.u32 %v330, 7
          %v332 = vsub.s32 %v299, %v331
          %v333 = vrot.slane %v287, %v332
          %v334 = vlaneseq
          %v335 = vshrl.u32 %v334, 7
          %v336 = vsub.s32 %v304, %v335
          %v337 = vrot.slane %v289, %v336
          %v338 = vsel %vm309, %v337, %v333
          %v339 = vlaneseq
          %v340 = vshrl.u32 %v339, 7
          %v341 = vsub.s32 %v311, %v340
          %v342 = vrot.slane %v291, %v341
          %v343 = vsel %vm316, %v342, %v338
          %v344 = vlaneseq
          %v345 = vshrl.u32 %v344, 7
          %v346 = vsub.s32 %v318, %v345
          %v347 = vrot.slane %v293, %v346
          %v348 = vsel %vm323, %v347, %v343
          %vm350 = vcmask 1040384
          %v351 = vsel %vm350, %v324, %v348
          %v352 = vld [vmem:[%s1] sm:$0xff]
          %v353 = vld [vmem:[%s1 + $0x8] sm:$0xff]
          %v354 = vld [vmem:[%s1 + $0x10] sm:$0xff]
          %v355 = vld [vmem:[%s1 + $0x18] sm:$0xff]
          %v356 = vld [vmem:[%s2] sm:$0x3]
          %vm357 = vcmask 261120
          %v359 = vsel %vm357, %v351, 0
          %361 = vmatprep.subr.mxu0 0.0
          %362 = vmatpush1.msra.mxu0 %v352
          %363 = vmatprep.subr.mxu0 0.0
          %364 = vmatpush1.msra.mxu0 %v353
          %365 = vmatprep.subr.mxu0 0.0
          %366 = vmatpush1.msra.mxu0 %v354
          %367 = vmatprep.subr.mxu0 0.0
          %368 = vmatpush1.msra.mxu0 %v355
          %369 = vmatprep.subr.mxu0 0.0
          %370 = vmatpush1.msra.mxu0 0.0
          %371 = vmatprep.subr.mxu0 0.0
          %372 = vmatpush1.msra.mxu0 0.0
          %373 = vmatprep.subr.mxu0 0.0
          %374 = vmatpush1.msra.mxu0 0.0
          %375 = vmatprep.subr.mxu0 0.0
          %376 = vmatpush1.msra.mxu0 0.0
          %377 = vmatprep.subr.mxu0 0.0
          %378 = vmatpush1.msra.mxu0 0.0
          %379 = vmatprep.subr.mxu0 0.0
          %380 = vmatpush1.msra.mxu0 0.0
          %381 = vmatprep.subr.mxu0 0.0
          %382 = vmatpush1.msra.mxu0 0.0
          %383 = vmatprep.subr.mxu0 0.0
          %384 = vmatpush1.msra.mxu0 0.0
          %385 = vmatprep.subr.mxu0 0.0
          %386 = vmatpush1.msra.mxu0 0.0
          %387 = vmatprep.subr.mxu0 0.0
          %388 = vmatpush1.msra.mxu0 0.0
          %389 = vmatprep.subr.mxu0 0.0
          %390 = vmatpush1.msra.mxu0 0.0
          %391 = vmatprep.subr.mxu0 0.0
          %392 = vmatpush1.msra.mxu0 0.0
          %393 = vmatprep.subr.mxu0 0.0
          %394 = vmatpush1.msra.mxu0 0.0
          %395 = vmatprep.subr.mxu0 0.0
          %396 = vmatpush1.msra.mxu0 0.0
          %397 = vmatprep.subr.mxu0 0.0
          %398 = vmatpush1.msra.mxu0 0.0
          %399 = vmatprep.subr.mxu0 0.0
          %400 = vmatpush1.msra.mxu0 0.0
          %401 = vmatprep.subr.mxu0 0.0
          %402 = vmatpush1.msra.mxu0 0.0
          %403 = vmatprep.subr.mxu0 0.0
          %404 = vmatpush1.msra.mxu0 0.0
          %405 = vmatprep.subr.mxu0 0.0
          %406 = vmatpush1.msra.mxu0 0.0
          %407 = vmatprep.subr.mxu0 0.0
          %408 = vmatpush1.msra.mxu0 0.0
          %409 = vmatprep.subr.mxu0 0.0
          %410 = vmatpush1.msra.mxu0 0.0
          %411 = vmatprep.subr.mxu0 0.0
          %412 = vmatpush1.msra.mxu0 0.0
          %413 = vmatprep.subr.mxu0 0.0
          %414 = vmatpush1.msra.mxu0 0.0
          %415 = vmatprep.subr.mxu0 0.0
          %416 = vmatpush1.msra.mxu0 0.0
          %417 = vmatprep.subr.mxu0 0.0
          %418 = vmatpush1.msra.mxu0 0.0
          %419 = vmatprep.subr.mxu0 0.0
          %420 = vmatpush1.msra.mxu0 0.0
          %421 = vmatprep.subr.mxu0 0.0
          %422 = vmatpush1.msra.mxu0 0.0
          %423 = vmatprep.subr.mxu0 0.0
          %424 = vmatpush1.msra.mxu0 0.0
          %425 = vmatprep.mubr.f32.mxu0 0.0
          %426 = vmatmul.mubr.f32.gmra.mrb[0].mxu0 %v359
          %v427 = vpop.f32.mrb[0].mxu0
          %v428 = vadd.f32 0.0, %v427
          %v429 = vpop.f32.mrb[0].mxu0
          %430 = vdwg.mxu0
          %v431 = vmax.f32 %v428, 0.0
          %vm432 = vcmask 15360
          %v434 = vsel %vm432, %v431, 0
          %vm436 = vcmask 1041408
          %v438 = vsel %vm436, %v356, 0
          %440 = vmatprep.subr.mxu0 0.0
          %441 = vmatpush1.msra.mxu0 %v438
          %442 = vmatprep.subr.mxu0 0.0
          %443 = vmatpush1.msra.mxu0 0.0
          %444 = vmatprep.subr.mxu0 0.0
          %445 = vmatpush1.msra.mxu0 0.0
          %446 = vmatprep.subr.mxu0 0.0
          %447 = vmatpush1.msra.mxu0 0.0
          %448 = vmatprep.subr.mxu0 0.0
          %449 = vmatpush1.msra.mxu0 0.0
          %450 = vmatprep.subr.mxu0 0.0
          %451 = vmatpush1.msra.mxu0 0.0
          %452 = vmatprep.subr.mxu0 0.0
          %453 = vmatpush1.msra.mxu0 0.0
          %454 = vmatprep.subr.mxu0 0.0
          %455 = vmatpush1.msra.mxu0 0.0
          %456 = vmatprep.subr.mxu0 0.0
          %457 = vmatpush1.msra.mxu0 0.0
          %458 = vmatprep.subr.mxu0 0.0
          %459 = vmatpush1.msra.mxu0 0.0
          %460 = vmatprep.subr.mxu0 0.0
          %461 = vmatpush1.msra.mxu0 0.0
          %462 = vmatprep.subr.mxu0 0.0
          %463 = vmatpush1.msra.mxu0 0.0
          %464 = vmatprep.subr.mxu0 0.0
          %465 = vmatpush1.msra.mxu0 0.0
          %466 = vmatprep.subr.mxu0 0.0
          %467 = vmatpush1.msra.mxu0 0.0
          %468 = vmatprep.subr.mxu0 0.0
          %469 = vmatpush1.msra.mxu0 0.0
          %470 = vmatprep.subr.mxu0 0.0
          %471 = vmatpush1.msra.mxu0 0.0
          %472 = vmatprep.subr.mxu0 0.0
          %473 = vmatpush1.msra.mxu0 0.0
          %474 = vmatprep.subr.mxu0 0.0
          %475 = vmatpush1.msra.mxu0 0.0
          %476 = vmatprep.subr.mxu0 0.0
          %477 = vmatpush1.msra.mxu0 0.0
          %478 = vmatprep.subr.mxu0 0.0
          %479 = vmatpush1.msra.mxu0 0.0
          %480 = vmatprep.subr.mxu0 0.0
          %481 = vmatpush1.msra.mxu0 0.0
          %482 = vmatprep.subr.mxu0 0.0
          %483 = vmatpush1.msra.mxu0 0.0
          %484 = vmatprep.subr.mxu0 0.0
          %485 = vmatpush1.msra.mxu0 0.0
          %486 = vmatprep.subr.mxu0 0.0
          %487 = vmatpush1.msra.mxu0 0.0
          %488 = vmatprep.subr.mxu0 0.0
          %489 = vmatpush1.msra.mxu0 0.0
          %490 = vmatprep.subr.mxu0 0.0
          %491 = vmatpush1.msra.mxu0 0.0
          %492 = vmatprep.subr.mxu0 0.0
          %493 = vmatpush1.msra.mxu0 0.0
          %494 = vmatprep.subr.mxu0 0.0
          %495 = vmatpush1.msra.mxu0 0.0
          %496 = vmatprep.subr.mxu0 0.0
          %497 = vmatpush1.msra.mxu0 0.0
          %498 = vmatprep.subr.mxu0 0.0
          %499 = vmatpush1.msra.mxu0 0.0
          %500 = vmatprep.subr.mxu0 0.0
          %501 = vmatpush1.msra.mxu0 0.0
          %502 = vmatprep.subr.mxu0 0.0
          %503 = vmatpush1.msra.mxu0 0.0
          %504 = vmatprep.mubr.f32.mxu0 0.0
          %505 = vmatmul.mubr.f32.gmra.mrb[0].mxu0 %v434
          %v506 = vpop.f32.mrb[0].mxu0
          %v507 = vadd.f32 0.0, %v506
          %v508 = vpop.f32.mrb[0].mxu0
          %509 = vdwg.mxu0
          %v511 = vrot.slane %v507, 1
          %v513 = vadd.f32 %v507, %v511
          %v514 = vxor.u32 %v513, 2147483648
          %v515 = vmul.f32 %v514, 1.442695
          %v516 = vpow.pop %v515
          %v517 = vadd.f32 %v516, 1.0
          %v518 = vrcp.pop %v517
          %v519 = vmul.f32 1.0, %v518
          %vm520 = vcmask 253952
          %521 = vst.msk [vmem:[%s203] sm:$0x1] %vm520, %v519
        $region44: #{tpu_custom_call.1} parent=31 // pred_fallthru
          _
        %s522 = sand.u32 %s110, 1
        %s523 = scalar_lea.sflag [#allocation6], %s522
        %s524 = sand.u32 %s110, 1
        %s525 = scalar_lea.vmem [#allocation7], %s524
        // Predicated region
        $region45: #{tpu_custom_call.1} parent=31 // pred_check
          %p526 = pneg %p120
        $region46: #{tpu_custom_call.1} parent=31 // pred_check_branch
          %528 = sbr.rel (%p526) target = $region48
        $region47: #{tpu_custom_call.1} parent=31 // pred_region
          %s530 = ssub.s32 16, 16
          %531 = vsyncadd %s523, %s530
          %s532 = smul.addr %s24, 16
          %s533 = scalar_lea.hbm %s3, %s532
          %s535 = sshll.u32 %s525, 4
          %s536 = int_to_ptr.vmem [resolvable:$true] %s535
          %538 = dma.vmem_to_hbm [thread:$0]  %s536, 16, %s533, %s523
        $region48: #{tpu_custom_call.1} parent=31 // pred_fallthru
          _
      $region32: #{tpu_custom_call.1} parent=5 // pred_fallthru
        _
      %p539 = scmp.le.s32.totalorder 2, %s15
      // Predicated region
      $region49: #{tpu_custom_call.1} parent=5 // pred_check
        %p540 = pneg %p539
      $region50: #{tpu_custom_call.1} parent=5 // pred_check_branch
        %542 = sbr.rel (%p540) target = $region52
      $region51: #{tpu_custom_call.1} parent=5 // pred_region
        %s543 = ssub.s32 %s15, 2
        // Predicated region
        $region53: #{tpu_custom_call.1} parent=51 // pred_check
          %p544 = pneg %p126
        $region54: #{tpu_custom_call.1} parent=51 // pred_check_branch
          %546 = sbr.rel (%p544) target = $region56
        $region55: #{tpu_custom_call.1} parent=51 // pred_region
          %s547 = sand.u32 %s111, 1
          %s548 = scalar_lea.sflag [#allocation6], %s547
          %s549 = sand.u32 %s111, 1
          %s550 = scalar_lea.vmem [#allocation7], %s549
          %551 = dma.done %s548, 16
        $region56: #{tpu_custom_call.1} parent=51 // pred_fallthru
          _
      $region52: #{tpu_custom_call.1} parent=5 // pred_fallthru
        _
    $region6: #{tpu_custom_call.1} parent=1 // loop_footer
      %s19 = sadd.s32 1, %s15
    $region7: #{tpu_custom_call.1} parent=1 // loop_footer_branch
      %14 = sbr.rel target = $region3
    $region8: #{tpu_custom_call.1} parent=1 // loop_exit
      _
    %552 = vsyncpa [#allocation5], 1
    %s553 = scalar_lea.sflag [#allocation5], 1
    %554 = vsyncpa %s553, 1
    %555 = vsyncpa [#allocation6], 1
    %s556 = scalar_lea.sflag [#allocation6], 1
    %557 = vsyncpa %s556, 1

</llo_original>
